<compile_context>
chip_gen: v6e
topology: v6e:2x2x1
jax: 0.10.0
libtpu: 0.0.40
codegen_flags: <defaults>
</compile_context>

<pallas_src>
import functools

import jax
import jax.numpy as jnp
from jax import lax
from jax.experimental import pallas as pl
from jax.experimental.pallas import tpu as pltpu

_VMEM_BUDGET_BYTES = 16 * 1024 * 1024   # target for the double-buffered blocks
_VMEM_LIMIT_BYTES = 32 * 1024 * 1024    # scoped-VMEM request (>= v5e's 16 MiB default)


def _round_up(x, m):
    return -(-x // m) * m


def _nscst_rowsum_kernel(lp_ref, tok_ref, out_ref, *, end_idx):
    """One row tile: out[n, 0] = sum_t logprob[n, t] * mask[n, t].

    mask[n, t] = 1 for t == 0, else (tok[n, t-1] != end_idx).
    Pure VPU/XLU work plus one tiny MXU matmul; no cross-step state.
    """
    lp = lp_ref[...].astype(jnp.float32)                      # (tm, T)
    not_end = (tok_ref[...] != end_idx).astype(jnp.float32)   # (tm, T) in {0,1}

    t = lp.shape[1]
    # Shift `not_end` right by one position along T with a (T,T) sub-permutation
    # matrix on the idle MXU:  (not_end @ S)[:, j] = not_end[:, j-1], column 0 = 0.
    # Each output element selects a single 0/1 input, so the result is exact.
    row = lax.broadcasted_iota(jnp.int32, (t, t), 0)
    col = lax.broadcasted_iota(jnp.int32, (t, t), 1)
    shift = (col == row + 1).astype(jnp.float32)
    prev_ok = jnp.dot(not_end, shift, preferred_element_type=jnp.float32)

    lane = lax.broadcasted_iota(jnp.int32, lp.shape, 1)
    mask = jnp.where(lane == 0, jnp.float32(1.0), prev_ok)

    # Cross-lane reduce (XLU) straight into the small per-row output block.
    out_ref[...] = jnp.sum(lp * mask, axis=1, keepdims=True)  # (tm, 1)


def nscst_loss(sampled_logprobs, sampled_seqs, sampled_score, *, end_idx, sample_n):
    """Pallas implementation of Nscst_Loss.forward -> scalar mean loss (float32).

    sampled_logprobs: (N, T) float (any float dtype; cast in-kernel)
    sampled_seqs:     (N, T) int token ids (any int dtype; streamed as-is)
    sampled_score:    (B, sample_n) float scores from the external scorer, N == B*sample_n
    """
    n_rows, seq_len = sampled_logprobs.shape
    assert sampled_seqs.shape == (n_rows, seq_len)

    # --- self-critical baseline / reward: tiny (B, sample_n) math in plain JAX ---
    # (sample_n == 1 divides by zero, mirroring the original PyTorch op.)
    score = sampled_score.astype(jnp.float32)
    baseline = (jnp.sum(score, axis=1, keepdims=True) - score) / float(sample_n - 1)
    reward = (score - baseline).reshape(-1)                   # (N,)

    # --- row tiling: largest tile within the lane-padded VMEM budget ---
    lane_t = _round_up(seq_len, 128)
    per_row_bytes = 2 * (                                     # double-buffered
        lane_t * (sampled_logprobs.dtype.itemsize + sampled_seqs.dtype.itemsize)
        + 128 * 4)                                            # (tm,1) out pads to 128 lanes
    tm_cap = max(8, (_VMEM_BUDGET_BYTES // per_row_bytes) // 8 * 8)
    if n_rows <= 8:
        tm = n_rows            # single block; second-minor equals the full dim
    else:
        tm = min(tm_cap, (n_rows // 8) * 8)
    grid = pl.cdiv(n_rows, tm)

    row_sums = pl.pallas_call(
        functools.partial(_nscst_rowsum_kernel, end_idx=int(end_idx)),
        out_shape=jax.ShapeDtypeStruct((n_rows, 1), jnp.float32),
        grid_spec=pltpu.PrefetchScalarGridSpec(
            num_scalar_prefetch=0,
            grid=(grid,),
            in_specs=[
                pl.BlockSpec((tm, seq_len), lambda i: (i, 0)),   # log-probs
                pl.BlockSpec((tm, seq_len), lambda i: (i, 0)),   # token ids
            ],
            out_specs=pl.BlockSpec((tm, 1), lambda i: (i, 0)),   # per-row masked sums
        ),
        compiler_params=pltpu.CompilerParams(
            dimension_semantics=("parallel",),   # independent tiles -> megacore on v7x
            vmem_limit_bytes=_VMEM_LIMIT_BYTES),
    )(sampled_logprobs, sampled_seqs)

    # loss = mean_n( sum_t( -lp * r * mask ) ) = -(reward . row_sums) / N
    return -jnp.sum(row_sums[:, 0] * reward) / jnp.float32(n_rows)


def _reference(sampled_logprobs, sampled_seqs, sampled_score, end_idx, sample_n):
    """Pure-JAX transcription of Nscst_Loss.forward (given scorer outputs)."""
    score = sampled_score.astype(jnp.float32)
    baseline = (jnp.sum(score, axis=1, keepdims=True) - score) / float(sample_n - 1)
    reward = (score - baseline).reshape(-1)
    reward = jnp.repeat(reward[:, None], sampled_logprobs.shape[1], axis=1)
    mask = (sampled_seqs != end_idx).astype(jnp.float32)
    mask = jnp.concatenate(
        [jnp.ones((mask.shape[0], 1), jnp.float32), mask[:, :-1]], axis=1)
    loss = -sampled_logprobs.astype(jnp.float32) * reward * mask
    return jnp.sum(loss, axis=1).mean()


if __name__ == "__main__":
    key = jax.random.PRNGKey(0)
    k1, k2, k3 = jax.random.split(key, 3)

    batch, sample_n, seq_len, vocab_size, end_idx = 2, 5, 24, 32, 9
    n_rows = batch * sample_n

    # sampled log-probabilities (<= 0) and sampled token ids
    sampled_logprobs = -jnp.abs(
        jax.random.normal(k1, (n_rows, seq_len), jnp.float32))
    sampled_seqs = jax.random.randint(
        k2, (n_rows, seq_len), 0, vocab_size, jnp.int32)
    # TODO(synk): score_util.compute_batch_score (CIDEr-style scorer over string
    # references) runs on host; its (B, sample_n) scores are an input here.
    sampled_score = jax.random.uniform(k3, (batch, sample_n), jnp.float32)

    out = nscst_loss(sampled_logprobs, sampled_seqs, sampled_score,
                     end_idx=end_idx, sample_n=sample_n)
    out = jax.block_until_ready(out)

    ref = _reference(sampled_logprobs, sampled_seqs, sampled_score,
                     end_idx, sample_n)
    assert jnp.allclose(out, ref, rtol=1e-5, atol=1e-6), (out, ref)
    print("KERNEL_OK")
</pallas_src>

<mosaic_0001>
module attributes {stable_mosaic.version = 11 : i64} {
  func.func @_nscst_rowsum_kernel(%arg0: i32, %arg1: memref<8x24xf32, #tpu.memory_space<vmem>>, %arg2: memref<8x24xi32, #tpu.memory_space<vmem>>, %arg3: memref<8x1xf32, #tpu.memory_space<vmem>>) attributes {dimension_semantics = [#tpu.dimension_semantics<parallel>], iteration_bounds = array<i64: 2>, scalar_prefetch = 0 : i64, scratch_operands = 0 : i64, tpu.core_type = #tpu.core_type<tc>, window_params = [{transform_indices = @transform_0, window_bounds = array<i64: 8, 24>}, {transform_indices = @transform_1, window_bounds = array<i64: 8, 24>}, {transform_indices = @transform_2, window_bounds = array<i64: 8, 1>}]} {
    %c0 = arith.constant 0 : index
    %c0_0 = arith.constant 0 : index
    %0 = vector.load %arg1[%c0, %c0_0] : memref<8x24xf32, #tpu.memory_space<vmem>>, vector<8x24xf32>
    %c0_1 = arith.constant 0 : index
    %c0_2 = arith.constant 0 : index
    %1 = vector.load %arg2[%c0_1, %c0_2] : memref<8x24xi32, #tpu.memory_space<vmem>>, vector<8x24xi32>
    %c9_i32 = arith.constant 9 : i32
    %2 = vector.broadcast %c9_i32 : i32 to vector<8x24xi32>
    %3 = arith.cmpi ne, %1, %2 : vector<8x24xi32>
    %4 = arith.extui %3 : vector<8x24xi1> to vector<8x24xi32>
    %5 = arith.sitofp %4 : vector<8x24xi32> to vector<8x24xf32>
    %6 = tpu.iota {dimensions = array<i32: 0>} : vector<24x24xi32>
    %7 = tpu.iota {dimensions = array<i32: 1>} : vector<24x24xi32>
    %c1_i32 = arith.constant 1 : i32
    %8 = vector.broadcast %c1_i32 : i32 to vector<24x24xi32>
    %9 = arith.addi %6, %8 : vector<24x24xi32>
    %10 = arith.cmpi eq, %7, %9 : vector<24x24xi32>
    %11 = arith.extui %10 : vector<24x24xi1> to vector<24x24xi32>
    %12 = arith.sitofp %11 : vector<24x24xi32> to vector<24x24xf32>
    %cst = arith.constant dense<0.000000e+00> : vector<8x24xf32>
    %13 = tpu.matmul %5, %12, %cst {dimension_numbers = #tpu.dot_dimension_numbers<[1], [0], [0], [1], [0, 0, 1, 1], [], []>} : vector<8x24xf32>, vector<24x24xf32>, vector<8x24xf32> -> vector<8x24xf32>
    %14 = tpu.iota {dimensions = array<i32: 1>} : vector<8x24xi32>
    %c0_i32 = arith.constant 0 : i32
    %15 = vector.broadcast %c0_i32 : i32 to vector<8x24xi32>
    %16 = arith.cmpi eq, %14, %15 : vector<8x24xi32>
    %cst_3 = arith.constant 1.000000e+00 : f32
    %17 = vector.broadcast %cst_3 : f32 to vector<8x24xf32>
    %18 = arith.select %16, %17, %13 : vector<8x24xi1>, vector<8x24xf32>
    %19 = arith.mulf %0, %18 : vector<8x24xf32>
    %cst_4 = arith.constant dense<0.000000e+00> : vector<8xf32>
    %20 = vector.multi_reduction <add>, %19, %cst_4 [1] : vector<8x24xf32> to vector<8xf32>
    %21 = vector.shape_cast %20 : vector<8xf32> to vector<8x1xf32>
    %c0_5 = arith.constant 0 : index
    %c0_6 = arith.constant 0 : index
    %22 = vector.load %arg3[%c0_5, %c0_6] : memref<8x1xf32, #tpu.memory_space<vmem>>, vector<8x1xf32>
    tpu.vector_store %arg3[%c0_5, %c0_6], %21 {strides = array<i32>} : memref<8x1xf32, #tpu.memory_space<vmem>>, vector<8x1xf32>,
    return
  }
  func.func @transform_0(%arg0: i32) -> (i32, i32) {
    %c0_i32 = arith.constant 0 : i32
    %c0_i32_0 = arith.constant 0 : i32
    return %arg0, %c0_i32 : i32, i32
  }
  func.func @transform_1(%arg0: i32) -> (i32, i32) {
    %c0_i32 = arith.constant 0 : i32
    %c0_i32_0 = arith.constant 0 : i32
    return %arg0, %c0_i32 : i32, i32
  }
  func.func @transform_2(%arg0: i32) -> (i32, i32) {
    %c0_i32 = arith.constant 0 : i32
    %c0_i32_0 = arith.constant 0 : i32
    return %arg0, %c0_i32 : i32, i32
  }
}

</mosaic_0001>

<llo_original>
// kernel: tpu_custom_call.1
$region0: #{tpu_custom_call.1}
  #allocation0 [shape = 'u32[]', space=smem, size = 0x4, offset = 0x4, fixed_abs, tag = 'smem constant byte address 0x4 - core index']
  #allocation1 [shape = 'u32[144,128]{1,0:T(1,128)}', space=vmem, size = 0x12000, scoped, tag = 'internal scratch']
  %s0 = inlined_call_operand.hbm [shape: f32[10,24], index: 0, kind: input, shape index: {}]
  %s1 = inlined_call_operand.hbm [shape: s32[10,24], index: 1, kind: input, shape index: {}]
  %s2 = inlined_call_operand.vmem [shape: f32[10,1], index: 2, kind: output, shape index: {}]
  %s3 = sld [smem:[#allocation0]]
  $region49: #{tpu_custom_call.1} parent=0
    _
  %s5 = ssub.s32 1, %s3
  %s6 = scalar_select 0, %s5, %s3
  $region1: #{tpu_custom_call.1} parent=0
    #allocation2 [shape = 'u8[8192]{0}', space=vmem, size = 0x2000, scoped, tag = 'input window, operand 0']
    #allocation3 [shape = 's32[2]{0}', space=sflag, size = 0x8, scoped, tag = 'scoped memory for tpu_custom_call.1']
    #allocation4 [shape = 'u8[8192]{0}', space=vmem, size = 0x2000, scoped, tag = 'input window, operand 1']
    #allocation5 [shape = 's32[2]{0}', space=sflag, size = 0x8, scoped, tag = 'scoped memory for tpu_custom_call.1']
    %7 = vsyncpa [#allocation3], 0
    %s8 = scalar_lea.sflag [#allocation3], 1
    %9 = vsyncpa %s8, 0
    %10 = vsyncpa [#allocation5], 0
    %s11 = scalar_lea.sflag [#allocation5], 1
    %12 = vsyncpa %s11, 0
    loop: start=0, step=1, limit=4
    $region2: #{tpu_custom_call.1} parent=1 // loop_pre_header
      _
    $region3: #{tpu_custom_call.1} parent=1 // loop_header
      %s14 = sphi 0, %s18
      %p15 = scmp.ge.s32.totalorder %s14, 4
      %s24 = sphi 0, %s26
      %s27 = sphi 0, %s24
      %s28 = sphi 0, %s27
      %s44 = sphi 0, %s28
      %s50 = sphi 0, %s52
      %s53 = sphi 0, %s50
      %s54 = sphi 0, %s53
      %s70 = sphi 0, %s54
      %s76 = sphi 0, %s78
      %s79 = sphi 0, %s76
      %s80 = sphi 0, %s79
      %s96 = sphi 0, %s80
    $region4: #{tpu_custom_call.1} parent=1 // loop_header_branch
      %17 = sbr.rel (%p15) target = $region8
    $region5: #{tpu_custom_call.1} parent=1 // loop_body
      %s19 = ssub.s32 %s14, 1
      %s20 = ssub.s32 %s14, 2
      %s21 = sadd.s32 %s14, 1
      %s22 = ssub.s32 %s14, %s21
      %p23 = scmp.eq.s32.totalorder %s22, 0
      %s25 = sadd.s32 %s24, 1
      %s26 = scalar_select %p23, %s24, %s25
      %p29 = pneg %p23
      %p30 = scmp.eq.s32.totalorder %s14, 1
      %p31 = por %p29, %p30
      %p32 = scmp.ne.s32.totalorder %s24, %s27
      %p33 = scmp.eq.s32.totalorder %s14, 0
      %p34 = por %p32, %p33
      %p35 = scmp.ne.s32.totalorder %s24, %s27
      %p36 = scmp.eq.s32.totalorder %s19, 1
      %p37 = por %p35, %p36
      %p38 = scmp.ne.s32.totalorder %s27, %s28
      %p39 = scmp.eq.s32.totalorder %s19, 0
      %p40 = por %p38, %p39
      %p41 = scmp.ne.s32.totalorder %s27, %s28
      %p42 = scmp.eq.s32.totalorder %s20, 1
      %p43 = por %p41, %p42
      %p45 = scmp.ne.s32.totalorder %s28, %s44
      %p46 = scmp.eq.s32.totalorder %s20, 0
      %p47 = por %p45, %p46
      %s48 = ssub.s32 %s14, %s21
      %p49 = scmp.eq.s32.totalorder %s48, 0
      %s51 = sadd.s32 %s50, 1
      %s52 = scalar_select %p49, %s50, %s51
      %p55 = pneg %p49
      %p56 = scmp.eq.s32.totalorder %s14, 1
      %p57 = por %p55, %p56
      %p58 = scmp.ne.s32.totalorder %s50, %s53
      %p59 = scmp.eq.s32.totalorder %s14, 0
      %p60 = por %p58, %p59
      %p61 = scmp.ne.s32.totalorder %s50, %s53
      %p62 = scmp.eq.s32.totalorder %s19, 1
      %p63 = por %p61, %p62
      %p64 = scmp.ne.s32.totalorder %s53, %s54
      %p65 = scmp.eq.s32.totalorder %s19, 0
      %p66 = por %p64, %p65
      %p67 = scmp.ne.s32.totalorder %s53, %s54
      %p68 = scmp.eq.s32.totalorder %s20, 1
      %p69 = por %p67, %p68
      %p71 = scmp.ne.s32.totalorder %s54, %s70
      %p72 = scmp.eq.s32.totalorder %s20, 0
      %p73 = por %p71, %p72
      %s74 = ssub.s32 %s14, %s21
      %p75 = scmp.eq.s32.totalorder %s74, 0
      %s77 = sadd.s32 %s76, 1
      %s78 = scalar_select %p75, %s76, %s77
      %p81 = pneg %p75
      %p82 = scmp.eq.s32.totalorder %s14, 1
      %p83 = por %p81, %p82
      %p84 = scmp.ne.s32.totalorder %s76, %s79
      %p85 = scmp.eq.s32.totalorder %s14, 0
      %p86 = por %p84, %p85
      %p87 = scmp.ne.s32.totalorder %s76, %s79
      %p88 = scmp.eq.s32.totalorder %s19, 1
      %p89 = por %p87, %p88
      %p90 = scmp.ne.s32.totalorder %s79, %s80
      %p91 = scmp.eq.s32.totalorder %s19, 0
      %p92 = por %p90, %p91
      %p93 = scmp.ne.s32.totalorder %s79, %s80
      %p94 = scmp.eq.s32.totalorder %s20, 1
      %p95 = por %p93, %p94
      %p97 = scmp.ne.s32.totalorder %s80, %s96
      %p98 = scmp.eq.s32.totalorder %s20, 0
      %p99 = por %p97, %p98
      %p100 = scmp.le.s32.totalorder 1, %s14
      %p101 = scmp.lt.s32.totalorder %s14, 3
      %p102 = pnand %p100, %p101
      %p103 = pneg %p102
      // Predicated region
      $region9: #{tpu_custom_call.1} parent=5 // pred_check
        _
      $region10: #{tpu_custom_call.1} parent=5 // pred_check_branch
        %105 = sbr.rel (%p102) target = $region12
      $region11: #{tpu_custom_call.1} parent=5 // pred_region
        %s106 = ssub.s32 %s14, 1
      $region12: #{tpu_custom_call.1} parent=5 // pred_fallthru
        _
      %p107 = scmp.lt.s32.totalorder %s14, 2
      // Predicated region
      $region13: #{tpu_custom_call.1} parent=5 // pred_check
        %p108 = pneg %p107
      $region14: #{tpu_custom_call.1} parent=5 // pred_check_branch
        %110 = sbr.rel (%p108) target = $region16
      $region15: #{tpu_custom_call.1} parent=5 // pred_region
        // Predicated region
        $region17: #{tpu_custom_call.1} parent=15 // pred_check
          %p111 = pneg %p34
        $region18: #{tpu_custom_call.1} parent=15 // pred_check_branch
          %113 = sbr.rel (%p111) target = $region20
        $region19: #{tpu_custom_call.1} parent=15 // pred_region
          %s114 = sand.u32 %s24, 1
          %s115 = scalar_lea.sflag [#allocation3], %s114
          %s116 = sand.u32 %s24, 1
          %s117 = smul.addr %s116, 8
          %s118 = scalar_lea.vmem [#allocation2], %s117
          %s120 = ssub.s32 128, 128
          %121 = vsyncadd %s115, %s120
          %s122 = smul.addr %s14, 128
          %s123 = scalar_lea.hbm %s0, %s122
          %s125 = sshll.u32 %s118, 4
          %s126 = int_to_ptr.vmem [resolvable:$true] %s125
          %128 = dma.hbm_to_vmem [thread:$0]  %s123, 128, %s126, %s115
        $region20: #{tpu_custom_call.1} parent=15 // pred_fallthru
          _
        // Predicated region
        $region21: #{tpu_custom_call.1} parent=15 // pred_check
          %p129 = pneg %p60
        $region22: #{tpu_custom_call.1} parent=15 // pred_check_branch
          %131 = sbr.rel (%p129) target = $region24
        $region23: #{tpu_custom_call.1} parent=15 // pred_region
          %s132 = sand.u32 %s50, 1
          %s133 = scalar_lea.sflag [#allocation5], %s132
          %s134 = sand.u32 %s50, 1
          %s135 = smul.addr %s134, 8
          %s136 = scalar_lea.vmem [#allocation4], %s135
          %s138 = ssub.s32 128, 128
          %139 = vsyncadd %s133, %s138
          %s140 = smul.addr %s14, 128
          %s141 = scalar_lea.hbm %s1, %s140
          %s143 = sshll.u32 %s136, 4
          %s144 = int_to_ptr.vmem [resolvable:$true] %s143
          %146 = dma.hbm_to_vmem [thread:$0]  %s141, 128, %s144, %s133
        $region24: #{tpu_custom_call.1} parent=15 // pred_fallthru
          _
      $region16: #{tpu_custom_call.1} parent=5 // pred_fallthru
        _
      %p147 = scmp.le.s32.totalorder 1, %s14
      %p148 = scmp.lt.s32.totalorder %s14, 3
      %p149 = pnand %p147, %p148
      %p150 = pneg %p149
      // Predicated region
      $region25: #{tpu_custom_call.1} parent=5 // pred_check
        _
      $region26: #{tpu_custom_call.1} parent=5 // pred_check_branch
        %152 = sbr.rel (%p149) target = $region28
      $region27: #{tpu_custom_call.1} parent=5 // pred_region
        %s153 = ssub.s32 %s14, 1
        %s154 = sand.u32 %s27, 1
        %s155 = scalar_lea.sflag [#allocation3], %s154
        %s156 = sand.u32 %s27, 1
        %s157 = smul.addr %s156, 8
        %s158 = scalar_lea.vmem [#allocation2], %s157
        // Predicated region
        $region29: #{tpu_custom_call.1} parent=27 // pred_check
          %p159 = pneg %p40
        $region30: #{tpu_custom_call.1} parent=27 // pred_check_branch
          %161 = sbr.rel (%p159) target = $region32
        $region31: #{tpu_custom_call.1} parent=27 // pred_region
          %162 = dma.done %s155, 128
        $region32: #{tpu_custom_call.1} parent=27 // pred_fallthru
          _
        %s163 = sand.u32 %s53, 1
        %s164 = scalar_lea.sflag [#allocation5], %s163
        %s165 = sand.u32 %s53, 1
        %s166 = smul.addr %s165, 8
        %s167 = scalar_lea.vmem [#allocation4], %s166
        // Predicated region
        $region33: #{tpu_custom_call.1} parent=27 // pred_check
          %p168 = pneg %p66
        $region34: #{tpu_custom_call.1} parent=27 // pred_check_branch
          %170 = sbr.rel (%p168) target = $region36
        $region35: #{tpu_custom_call.1} parent=27 // pred_region
          %171 = dma.done %s164, 128
        $region36: #{tpu_custom_call.1} parent=27 // pred_fallthru
          _
        %s172 = sand.u32 %s27, 1
        %s173 = scalar_lea.sflag [#allocation3], %s172
        %s174 = sand.u32 %s27, 1
        %s175 = smul.addr %s174, 8
        %s176 = scalar_lea.vmem [#allocation2], %s175
        %p177 = pneg %p40
        %p178 = pneg %p37
        %s179 = sand.u32 %s53, 1
        %s180 = scalar_lea.sflag [#allocation5], %s179
        %s181 = sand.u32 %s53, 1
        %s182 = smul.addr %s181, 8
        %s183 = scalar_lea.vmem [#allocation4], %s182
        %p184 = pneg %p66
        %p185 = pneg %p63
        %p186 = pneg %p92
        %p187 = pneg %p89
        %p188 = scmp.lt.s32.totalorder %s19, 1
        %s189 = scalar_select %p188, %s19, 1
        %s190 = smul.addr %s189, 8
        %s191 = scalar_lea.vmem %s2, %s190
        %p192 = scmp.lt.s32.totalorder %s19, 1
        %s193 = scalar_select %p192, %s19, 1
        %s194 = smul.addr %s193, 8
        %s195 = scalar_lea.vmem %s2, %s194
        %v196 = vld [vmem:[%s158] sm:$0xff]
        %v197 = vld [vmem:[%s167] sm:$0xff]
        %vm198 = vcmp.ne.s32.totalorder %v197, 9
        %v199 = vsel %vm198, 1, 0
        %v200 = vcvt.s32.f32 %v199
        %v201 = vlaneseq
        %v202 = vshrl.u32 %v201, 7
        %v203 = vadd.s32 %v202, 8
        %v204 = vadd.s32 %v202, 16
        %v205 = vlaneseq
        %v206 = vand.u32 %v205, 127
        %v207 = vadd.s32 %v202, 1
        %v208 = vadd.s32 %v203, 1
        %v209 = vadd.s32 %v204, 1
        %vm210 = vcmp.eq.s32.totalorder %v206, %v207
        %vm211 = vcmp.eq.s32.totalorder %v206, %v208
        %vm212 = vcmp.eq.s32.totalorder %v206, %v209
        %v213 = vsel %vm210, 1, 0
        %v214 = vsel %vm211, 1, 0
        %v215 = vsel %vm212, 1, 0
        %v216 = vcvt.s32.f32 %v213
        %v217 = vcvt.s32.f32 %v214
        %v218 = vcvt.s32.f32 %v215
        %vm219 = vcmask 195584
        %v221 = vsel %vm219, %v200, 0
        %223 = vmatprep.subr.mxu0 0.0
        %224 = vmatpush1.msra.mxu0 0.0
        %225 = vmatprep.subr.mxu0 0.0
        %226 = vmatpush1.msra.mxu0 0.0
        %227 = vmatprep.subr.mxu0 0.0
        %228 = vmatpush1.msra.mxu0 0.0
        %229 = vmatprep.subr.mxu0 0.0
        %230 = vmatpush1.msra.mxu0 0.0
        %231 = vmatprep.subr.mxu0 0.0
        %232 = vmatpush1.msra.mxu0 0.0
        %233 = vmatprep.subr.mxu0 0.0
        %234 = vmatpush1.msra.mxu0 0.0
        %235 = vmatprep.subr.mxu0 0.0
        %236 = vmatpush1.msra.mxu0 0.0
        %237 = vmatprep.subr.mxu0 0.0
        %238 = vmatpush1.msra.mxu0 0.0
        %239 = vmatprep.subr.mxu0 0.0
        %240 = vmatpush1.msra.mxu0 0.0
        %241 = vmatprep.subr.mxu0 0.0
        %242 = vmatpush1.msra.mxu0 0.0
        %243 = vmatprep.subr.mxu0 0.0
        %244 = vmatpush1.msra.mxu0 0.0
        %245 = vmatprep.subr.mxu0 0.0
        %246 = vmatpush1.msra.mxu0 0.0
        %247 = vmatprep.subr.mxu0 0.0
        %248 = vmatpush1.msra.mxu0 0.0
        %249 = vmatprep.subr.mxu0 0.0
        %250 = vmatpush1.msra.mxu0 %v218
        %251 = vmatprep.subr.mxu0 0.0
        %252 = vmatpush1.msra.mxu0 %v217
        %253 = vmatprep.subr.mxu0 0.0
        %254 = vmatpush1.msra.mxu0 %v216
        %255 = vmatprep.subr.mxu0 0.0
        %256 = vmatpush2.msra.mxu0 0.0
        %257 = vmatprep.subr.mxu0 0.0
        %258 = vmatpush2.msra.mxu0 0.0
        %259 = vmatprep.subr.mxu0 0.0
        %260 = vmatpush2.msra.mxu0 0.0
        %261 = vmatprep.subr.mxu0 0.0
        %262 = vmatpush2.msra.mxu0 0.0
        %263 = vmatprep.subr.mxu0 0.0
        %264 = vmatpush2.msra.mxu0 0.0
        %265 = vmatprep.subr.mxu0 0.0
        %266 = vmatpush2.msra.mxu0 0.0
        %267 = vmatprep.subr.mxu0 0.0
        %268 = vmatpush2.msra.mxu0 0.0
        %269 = vmatprep.subr.mxu0 0.0
        %270 = vmatpush2.msra.mxu0 0.0
        %271 = vmatprep.subr.mxu0 0.0
        %272 = vmatpush2.msra.mxu0 0.0
        %273 = vmatprep.subr.mxu0 0.0
        %274 = vmatpush2.msra.mxu0 0.0
        %275 = vmatprep.subr.mxu0 0.0
        %276 = vmatpush2.msra.mxu0 0.0
        %277 = vmatprep.subr.mxu0 0.0
        %278 = vmatpush2.msra.mxu0 0.0
        %279 = vmatprep.subr.mxu0 0.0
        %280 = vmatpush2.msra.mxu0 0.0
        %281 = vmatprep.subr.mxu0 0.0
        %282 = vmatpush2.msra.mxu0 0.0
        %283 = vmatprep.subr.mxu0 0.0
        %284 = vmatpush2.msra.mxu0 0.0
        %285 = vmatprep.subr.mxu0 0.0
        %286 = vmatpush2.msra.mxu0 0.0
        %287 = vmatprep.mubr.f32.mxu0 0.0
        %288 = vmatmul.mubr.f32.gmra.mxu0 %v221
        %v289 = vpop.f32.mrf.mxu0
        %v290 = vadd.f32 0.0, %v289
        %v291 = vpop.f32.mrf.mxu0
        %292 = vdwg.mxu0
        %vm293 = vcmp.eq.s32.totalorder %v206, 0
        %v294 = vsel %vm293, 1.0, %v290
        %v295 = vmul.f32 %v196, %v294
        %v296 = vsel %vm219, %v295, 0.0
        %297 = vadd.xlane.f32.xlu0 %v296
        %v298 = vpop.xlane.xlu0 %297
        %vm299 = vcmask 7168
        %300 = vst.msk [vmem:[%s195] sm:$0xff] %vm299, %v298
        %p301 = scmp.lt.s32.totalorder %s19, 1
        %s302 = scalar_select %p301, %s19, 1
        %s303 = smul.addr %s302, 8
        %s304 = scalar_lea.vmem %s2, %s303
        // Predicated region
        $region37: #{tpu_custom_call.1} parent=27 // pred_check
          %p305 = pneg %p89
        $region38: #{tpu_custom_call.1} parent=27 // pred_check_branch
          %307 = sbr.rel (%p305) target = $region40
        $region39: #{tpu_custom_call.1} parent=27 // pred_region
          _
        $region40: #{tpu_custom_call.1} parent=27 // pred_fallthru
          _
      $region28: #{tpu_custom_call.1} parent=5 // pred_fallthru
        _
      %p308 = scmp.le.s32.totalorder 2, %s14
      // Predicated region
      $region41: #{tpu_custom_call.1} parent=5 // pred_check
        %p309 = pneg %p308
      $region42: #{tpu_custom_call.1} parent=5 // pred_check_branch
        %311 = sbr.rel (%p309) target = $region44
      $region43: #{tpu_custom_call.1} parent=5 // pred_region
        %s312 = ssub.s32 %s14, 2
        // Predicated region
        $region45: #{tpu_custom_call.1} parent=43 // pred_check
          %p313 = pneg %p95
        $region46: #{tpu_custom_call.1} parent=43 // pred_check_branch
          %315 = sbr.rel (%p313) target = $region48
        $region47: #{tpu_custom_call.1} parent=43 // pred_region
          %p316 = scmp.lt.s32.totalorder %s20, 1
          %s317 = scalar_select %p316, %s20, 1
          %s318 = smul.addr %s317, 8
          %s319 = scalar_lea.vmem %s2, %s318
        $region48: #{tpu_custom_call.1} parent=43 // pred_fallthru
          _
      $region44: #{tpu_custom_call.1} parent=5 // pred_fallthru
        _
    $region6: #{tpu_custom_call.1} parent=1 // loop_footer
      %s18 = sadd.s32 1, %s14
    $region7: #{tpu_custom_call.1} parent=1 // loop_footer_branch
      %13 = sbr.rel target = $region3
    $region8: #{tpu_custom_call.1} parent=1 // loop_exit
      _
    %320 = vsyncpa [#allocation3], 1
    %s321 = scalar_lea.sflag [#allocation3], 1
    %322 = vsyncpa %s321, 1
    %323 = vsyncpa [#allocation5], 1
    %s324 = scalar_lea.sflag [#allocation5], 1
    %325 = vsyncpa %s324, 1

</llo_original>
